<compile_context>
chip_gen: v7x
topology: tpu7x:2x2x1
jax: 0.10.0
libtpu: 0.0.40
codegen_flags: <defaults>
</compile_context>

<pallas_src>
import functools

import jax
import jax.numpy as jnp
from jax.experimental import pallas as pl
from jax.experimental.pallas import tpu as pltpu

_LANES = 128


def _dqn_kernel(nchunk, rows, obs_ref, w0_ref, b0_ref, w1_ref, b1_ref,
                w2_ref, b2_ref, out_ref):
    """Fused 3-layer MLP on one batch tile, processed in `nchunk` row-chunks.

    Chunk j covers obs rows [j*rows, (j+1)*rows) of the tile and writes its
    (rows, A) result to lanes [j*A, (j+1)*A) of the lane-packed out block
    (out block shape (rows, nchunk*A)).  bf16 MXU operands, f32 accumulation,
    f32 bias/ReLU epilogue.
    """
    # Hoist the ~7 KiB of parameters into vregs once per grid step
    # (JAX does not CSE broadcast/load chains across the chunk loop).
    w0 = w0_ref[...]
    w1 = w1_ref[...]
    w2 = w2_ref[...]
    b0 = b0_ref[...]
    b1 = b1_ref[...]
    b2 = b2_ref[...]
    a = b2.shape[-1]

    for j in range(nchunk):
        # f32 -> bf16 cast happens here (hidden under the obs DMA) instead of
        # as a separate, un-hidden XLA op in the wrapper.
        x = obs_ref[pl.ds(j * rows, rows), :].astype(jnp.bfloat16)

        # fc0: Linear + ReLU
        h0 = jnp.dot(x, w0, preferred_element_type=jnp.float32)
        h0 = jnp.maximum(h0 + b0, 0.0)

        # hidden: Linear + ReLU
        h1 = jnp.dot(h0.astype(jnp.bfloat16), w1,
                     preferred_element_type=jnp.float32)
        h1 = jnp.maximum(h1 + b1, 0.0)

        # out: Linear (no activation); store into this chunk's lane group so
        # the out block (and its HBM writeback) stays 128-lane dense.
        o = jnp.dot(h1.astype(jnp.bfloat16), w2,
                    preferred_element_type=jnp.float32)
        out_ref[:, pl.ds(j * a, a)] = o + b2


def _choose_tiling(batch, action_space):
    """Pick (nchunk, tile_m, n_tiles).

    nchunk > 1 => lane-packed output: one batch tile's (tile_m, A) result is
    stored as a (tile_m // nchunk, nchunk*A == 128) block.  tile_m is always a
    multiple of 8*nchunk (sublane-aligned out blocks) and <= batch (the ragged
    tail is handled by a clipped boundary block, never by a block that is
    larger than the array).
    """
    packable = action_space < _LANES and _LANES % action_space == 0
    nchunk = _LANES // action_space if packable else 1
    if nchunk > 1 and batch < 8 * nchunk:
        nchunk = 1                      # tiny batch: packing would need a tile > batch
    quant = 8 * nchunk                  # out-block sublanes stay a multiple of 8
    cap = min(2048, 128 * nchunk)       # bounds rows-per-chunk (vreg pressure)

    if nchunk == 1 and batch <= cap:
        return 1, batch, 1              # single full-batch tile, no padding at all

    max_tile = min(cap, (batch // quant) * quant)
    need2 = batch >= 2 * quant          # give both v7x TensorCores a tile
    cands = []
    for t in range(quant, max_tile + 1, quant):
        n = -(-batch // t)              # cdiv
        if need2 and n < 2:
            continue
        cands.append((n, n * t - batch, t))     # (grid steps, padded tail rows, tile)
    # Prefer fewer grid steps (~0.35us each) as long as the padded tail stays
    # small; otherwise fall back to minimum padding.
    thresh = max(batch // 8, quant)
    ok = [c for c in cands if c[1] <= thresh]
    n, _, tile = min(ok if ok else cands)
    return nchunk, tile, n


@jax.jit
def dqn_forward(obs, params):
    """obs: [batch, obs_length] f32; params: dict of pre-transposed weights."""
    w0, b0, w1, b1, w2, b2 = (params["w0"], params["b0"], params["w1"],
                              params["b1"], params["w2"], params["b2"])
    batch, obs_length = obs.shape
    hidden = w0.shape[1]
    action_space = w2.shape[1]

    nchunk, tile_m, n_tiles = _choose_tiling(batch, action_space)
    rows = tile_m // nchunk             # rows per chunk == out-block sublanes
    out_w = nchunk * action_space       # 128 when lane-packed, else action_space
    padded = n_tiles * tile_m           # covered rows; NO jnp.pad -- the last obs
                                        # block is a clipped boundary block and its
                                        # garbage tail is sliced off below.

    flops = 2 * padded * (obs_length * hidden + hidden * hidden
                          + hidden * action_space)
    bytes_accessed = (batch * obs_length * 4             # obs streamed as f32
                      + (padded // nchunk) * out_w * 4   # lane-dense f32 output
                      + (w0.size + w1.size + w2.size) * 2  # weights (bf16)
                      + (b0.size + b1.size + b2.size) * 4)  # biases (f32)

    packed = pl.pallas_call(
        functools.partial(_dqn_kernel, nchunk, rows),
        out_shape=jax.ShapeDtypeStruct((padded // nchunk, out_w), jnp.float32),
        grid=(n_tiles,),
        in_specs=[
            # obs: tiled over batch, double-buffered by Pallas, streamed as f32.
            pl.BlockSpec((tile_m, obs_length), lambda i: (i, 0)),
            # Parameters: constant index_map -> fetched once, kept VMEM-resident.
            pl.BlockSpec((obs_length, hidden), lambda i: (0, 0)),
            pl.BlockSpec((1, hidden), lambda i: (0, 0)),
            pl.BlockSpec((hidden, hidden), lambda i: (0, 0)),
            pl.BlockSpec((1, hidden), lambda i: (0, 0)),
            pl.BlockSpec((hidden, action_space), lambda i: (0, 0)),
            pl.BlockSpec((1, action_space), lambda i: (0, 0)),
        ],
        out_specs=pl.BlockSpec((rows, out_w), lambda i: (i, 0)),
        compiler_params=pltpu.CompilerParams(
            dimension_semantics=("parallel",)),  # batch tiles shard over v7x TCs
        cost_estimate=pl.CostEstimate(flops=flops, transcendentals=0,
                                      bytes_accessed=bytes_accessed),
    )(obs, w0, b0, w1, b1, w2, b2)

    # Undo the per-tile lane packing.  The output is tiny (batch x A) compared
    # to obs, so this reshape/transpose is negligible; for nchunk == 1 it is a
    # pure no-op reshape.  Garbage rows from the clipped boundary block map to
    # row indices >= batch and are removed by the final slice.
    out = packed.reshape(n_tiles, rows, nchunk, action_space)
    out = out.transpose(0, 2, 1, 3).reshape(padded, action_space)
    return out[:batch]


def dqn_net_apply(params, obs, obs_map, edges, edges_feature):
    """Mirrors DQNNet.forward signature; extra args are unused (as in torch)."""
    obs = jnp.asarray(obs, dtype=jnp.float32)
    out = dqn_forward(obs, params)
    return out, [None]


def init_params(key, obs_length, hidden_size, action_space):
    """Deterministic synthetic parameters (shapes from DQNNet.__init__).

    Weights stored as [in, out] in bf16 (MXU operands); biases in f32.
    """
    ks = jax.random.split(key, 6)
    w0 = (jax.random.normal(ks[0], (obs_length, hidden_size), jnp.float32)
          * 0.1).astype(jnp.bfloat16)
    b0 = jax.random.normal(ks[1], (1, hidden_size), jnp.float32) * 0.01
    w1 = (jax.random.normal(ks[2], (hidden_size, hidden_size), jnp.float32)
          * 0.1).astype(jnp.bfloat16)
    b1 = jax.random.normal(ks[3], (1, hidden_size), jnp.float32) * 0.01
    w2 = (jax.random.normal(ks[4], (hidden_size, action_space), jnp.float32)
          * 0.1).astype(jnp.bfloat16)
    b2 = jax.random.normal(ks[5], (1, action_space), jnp.float32) * 0.01
    return dict(w0=w0, b0=b0, w1=w1, b1=b1, w2=w2, b2=b2)


def _reference(params, obs):
    """Pure-JAX reference mirroring the kernel's bf16-operand / f32-acc math."""
    x = obs.astype(jnp.bfloat16)
    h0 = jnp.maximum(
        jnp.dot(x, params["w0"], preferred_element_type=jnp.float32)
        + params["b0"], 0.0)
    h1 = jnp.maximum(
        jnp.dot(h0.astype(jnp.bfloat16), params["w1"],
                preferred_element_type=jnp.float32) + params["b1"], 0.0)
    return (jnp.dot(h1.astype(jnp.bfloat16), params["w2"],
                    preferred_element_type=jnp.float32) + params["b2"])


if __name__ == "__main__":
    # Small shapes consistent with the module's forward.
    obs_length = 16
    hidden_size = 32
    action_space = 8
    n_nodes = 4

    key = jax.random.PRNGKey(0)
    k_obs, k_map, k_param, k_obs2 = jax.random.split(key, 4)
    params = init_params(k_param, obs_length, hidden_size, action_space)

    # Case 1: tiny batch (single full-batch tile path).
    batch = 8
    obs = jax.random.normal(k_obs, (batch, obs_length), jnp.float32)
    # obs_map: [batch, n_nodes, 12+4] -- accepted but unused by forward.
    obs_map = jax.random.normal(k_map, (batch, n_nodes, 16), jnp.float32)

    out, aux = dqn_net_apply(params, obs, obs_map, None, None)
    out = jax.block_until_ready(out)
    ref = _reference(params, obs)
    assert out.shape == (batch, action_space)
    assert out.dtype == jnp.float32
    assert jnp.allclose(out, ref, atol=1e-2, rtol=1e-2)
    assert aux == [None]

    # Case 2: ragged medium batch -- exercises the lane-packed multi-tile path
    # with >=2 grid steps and a clipped boundary block (no padding copy).
    batch2 = 330
    obs2 = jax.random.normal(k_obs2, (batch2, obs_length), jnp.float32)
    out2, _ = dqn_net_apply(params, obs2, None, None, None)
    out2 = jax.block_until_ready(out2)
    ref2 = _reference(params, obs2)
    assert out2.shape == (batch2, action_space)
    assert out2.dtype == jnp.float32
    assert jnp.allclose(out2, ref2, atol=1e-2, rtol=1e-2)

    print("KERNEL_OK")
</pallas_src>

<mosaic_0001>
module attributes {stable_mosaic.version = 11 : i64} {
  func.func @_dqn_kernel(%arg0: i32, %arg1: memref<8x16xf32, #tpu.memory_space<vmem>>, %arg2: memref<16x32xbf16, #tpu.memory_space<vmem>>, %arg3: memref<1x32xf32, #tpu.memory_space<vmem>>, %arg4: memref<32x32xbf16, #tpu.memory_space<vmem>>, %arg5: memref<1x32xf32, #tpu.memory_space<vmem>>, %arg6: memref<32x8xbf16, #tpu.memory_space<vmem>>, %arg7: memref<1x8xf32, #tpu.memory_space<vmem>>, %arg8: memref<8x8xf32, #tpu.memory_space<vmem>>) attributes {dimension_semantics = [#tpu.dimension_semantics<parallel>], iteration_bounds = array<i64: 1>, scalar_prefetch = 0 : i64, scratch_operands = 0 : i64, tpu.core_type = #tpu.core_type<tc>, window_params = [{transform_indices = @transform_0, window_bounds = array<i64: 8, 16>}, {pipeline_mode = #tpu.pipeline_mode<synchronous>, transform_indices = @transform_1, window_bounds = array<i64: 16, 32>}, {pipeline_mode = #tpu.pipeline_mode<synchronous>, transform_indices = @transform_2, window_bounds = array<i64: 1, 32>}, {pipeline_mode = #tpu.pipeline_mode<synchronous>, transform_indices = @transform_3, window_bounds = array<i64: 32, 32>}, {pipeline_mode = #tpu.pipeline_mode<synchronous>, transform_indices = @transform_4, window_bounds = array<i64: 1, 32>}, {pipeline_mode = #tpu.pipeline_mode<synchronous>, transform_indices = @transform_5, window_bounds = array<i64: 32, 8>}, {pipeline_mode = #tpu.pipeline_mode<synchronous>, transform_indices = @transform_6, window_bounds = array<i64: 1, 8>}, {transform_indices = @transform_7, window_bounds = array<i64: 8, 8>}]} {
    %c0 = arith.constant 0 : index
    %c0_0 = arith.constant 0 : index
    %0 = vector.load %arg2[%c0, %c0_0] : memref<16x32xbf16, #tpu.memory_space<vmem>>, vector<16x32xbf16>
    %c0_1 = arith.constant 0 : index
    %c0_2 = arith.constant 0 : index
    %1 = vector.load %arg4[%c0_1, %c0_2] : memref<32x32xbf16, #tpu.memory_space<vmem>>, vector<32x32xbf16>
    %c0_3 = arith.constant 0 : index
    %c0_4 = arith.constant 0 : index
    %2 = vector.load %arg6[%c0_3, %c0_4] : memref<32x8xbf16, #tpu.memory_space<vmem>>, vector<32x8xbf16>
    %c0_5 = arith.constant 0 : index
    %c0_6 = arith.constant 0 : index
    %3 = vector.load %arg3[%c0_5, %c0_6] : memref<1x32xf32, #tpu.memory_space<vmem>>, vector<1x32xf32>
    %c0_7 = arith.constant 0 : index
    %c0_8 = arith.constant 0 : index
    %4 = vector.load %arg5[%c0_7, %c0_8] : memref<1x32xf32, #tpu.memory_space<vmem>>, vector<1x32xf32>
    %c0_9 = arith.constant 0 : index
    %c0_10 = arith.constant 0 : index
    %5 = vector.load %arg7[%c0_9, %c0_10] : memref<1x8xf32, #tpu.memory_space<vmem>>, vector<1x8xf32>
    %c0_11 = arith.constant 0 : index
    %c0_12 = arith.constant 0 : index
    %6 = vector.load %arg1[%c0_11, %c0_12] : memref<8x16xf32, #tpu.memory_space<vmem>>, vector<8x16xf32>
    %7 = arith.truncf %6 : vector<8x16xf32> to vector<8x16xbf16>
    %cst = arith.constant dense<0.000000e+00> : vector<8x32xf32>
    %8 = tpu.matmul %7, %0, %cst {dimension_numbers = #tpu.dot_dimension_numbers<[1], [0], [0], [1], [0, 0, 1, 1], [], []>} : vector<8x16xbf16>, vector<16x32xbf16>, vector<8x32xf32> -> vector<8x32xf32>
    %9 = vector.broadcast %3 : vector<1x32xf32> to vector<8x32xf32>
    %10 = arith.addf %8, %9 : vector<8x32xf32>
    %cst_13 = arith.constant 0.000000e+00 : f32
    %11 = vector.broadcast %cst_13 : f32 to vector<8x32xf32>
    %12 = arith.maximumf %10, %11 : vector<8x32xf32>
    %13 = arith.truncf %12 : vector<8x32xf32> to vector<8x32xbf16>
    %cst_14 = arith.constant dense<0.000000e+00> : vector<8x32xf32>
    %14 = tpu.matmul %13, %1, %cst_14 {dimension_numbers = #tpu.dot_dimension_numbers<[1], [0], [0], [1], [0, 0, 1, 1], [], []>} : vector<8x32xbf16>, vector<32x32xbf16>, vector<8x32xf32> -> vector<8x32xf32>
    %15 = vector.broadcast %4 : vector<1x32xf32> to vector<8x32xf32>
    %16 = arith.addf %14, %15 : vector<8x32xf32>
    %cst_15 = arith.constant 0.000000e+00 : f32
    %17 = vector.broadcast %cst_15 : f32 to vector<8x32xf32>
    %18 = arith.maximumf %16, %17 : vector<8x32xf32>
    %19 = arith.truncf %18 : vector<8x32xf32> to vector<8x32xbf16>
    %cst_16 = arith.constant dense<0.000000e+00> : vector<8x8xf32>
    %20 = tpu.matmul %19, %2, %cst_16 {dimension_numbers = #tpu.dot_dimension_numbers<[1], [0], [0], [1], [0, 0, 1, 1], [], []>} : vector<8x32xbf16>, vector<32x8xbf16>, vector<8x8xf32> -> vector<8x8xf32>
    %21 = vector.broadcast %5 : vector<1x8xf32> to vector<8x8xf32>
    %22 = arith.addf %20, %21 : vector<8x8xf32>
    %c0_17 = arith.constant 0 : index
    %c0_18 = arith.constant 0 : index
    %23 = vector.load %arg8[%c0_17, %c0_18] : memref<8x8xf32, #tpu.memory_space<vmem>>, vector<8x8xf32>
    tpu.vector_store %arg8[%c0_17, %c0_18], %22 {strides = array<i32>} : memref<8x8xf32, #tpu.memory_space<vmem>>, vector<8x8xf32>,
    return
  }
  func.func @transform_0(%arg0: i32) -> (i32, i32) {
    %c0_i32 = arith.constant 0 : i32
    %c0_i32_0 = arith.constant 0 : i32
    return %arg0, %c0_i32 : i32, i32
  }
  func.func @transform_1(%arg0: i32) -> (i32, i32) {
    %c0_i32 = arith.constant 0 : i32
    %c0_i32_0 = arith.constant 0 : i32
    %c0_i32_1 = arith.constant 0 : i32
    return %c0_i32, %c0_i32_0 : i32, i32
  }
  func.func @transform_2(%arg0: i32) -> (i32, i32) {
    %c0_i32 = arith.constant 0 : i32
    %c0_i32_0 = arith.constant 0 : i32
    %c0_i32_1 = arith.constant 0 : i32
    return %c0_i32, %c0_i32_0 : i32, i32
  }
  func.func @transform_3(%arg0: i32) -> (i32, i32) {
    %c0_i32 = arith.constant 0 : i32
    %c0_i32_0 = arith.constant 0 : i32
    %c0_i32_1 = arith.constant 0 : i32
    return %c0_i32, %c0_i32_0 : i32, i32
  }
  func.func @transform_4(%arg0: i32) -> (i32, i32) {
    %c0_i32 = arith.constant 0 : i32
    %c0_i32_0 = arith.constant 0 : i32
    %c0_i32_1 = arith.constant 0 : i32
    return %c0_i32, %c0_i32_0 : i32, i32
  }
  func.func @transform_5(%arg0: i32) -> (i32, i32) {
    %c0_i32 = arith.constant 0 : i32
    %c0_i32_0 = arith.constant 0 : i32
    %c0_i32_1 = arith.constant 0 : i32
    return %c0_i32, %c0_i32_0 : i32, i32
  }
  func.func @transform_6(%arg0: i32) -> (i32, i32) {
    %c0_i32 = arith.constant 0 : i32
    %c0_i32_0 = arith.constant 0 : i32
    %c0_i32_1 = arith.constant 0 : i32
    return %c0_i32, %c0_i32_0 : i32, i32
  }
  func.func @transform_7(%arg0: i32) -> (i32, i32) {
    %c0_i32 = arith.constant 0 : i32
    %c0_i32_0 = arith.constant 0 : i32
    return %arg0, %c0_i32 : i32, i32
  }
}

</mosaic_0001>

<llo_original>
// kernel: dqn_forward.1
$region0: #{dqn_forward.1}
  #allocation0 [shape = 'u32[]', space=smem, size = 0x4, offset = 0x4, fixed_abs, tag = 'smem constant byte address 0x4 - core index']
  #allocation1 [shape = 'u32[144,128]{1,0:T(1,128)}', space=vmem, size = 0x12000, scoped, tag = 'internal scratch']
  %s0 = inlined_call_operand.vmem [shape: f32[8,16], index: 0, kind: input, shape index: {}]
  %s1 = inlined_call_operand.vmem [shape: bf16[16,32], index: 1, kind: input, shape index: {}]
  %s2 = inlined_call_operand.vmem [shape: f32[1,32], index: 2, kind: input, shape index: {}]
  %s3 = inlined_call_operand.vmem [shape: bf16[32,32], index: 3, kind: input, shape index: {}]
  %s4 = inlined_call_operand.vmem [shape: f32[1,32], index: 4, kind: input, shape index: {}]
  %s5 = inlined_call_operand.vmem [shape: bf16[32,8], index: 5, kind: input, shape index: {}]
  %s6 = inlined_call_operand.hbm [shape: f32[1,8], index: 6, kind: input, shape index: {}]
  %s7 = inlined_call_operand.hbm [shape: f32[8,8], index: 7, kind: output, shape index: {}]
  %s8 = sld [smem:[#allocation0]]
  $region42: #{dqn_forward.1} parent=0
    _
  %s10 = ssub.s32 1, %s8
  %s11 = scalar_select 0, %s10, %s8
  $region1: #{dqn_forward.1} parent=0
    #allocation2 [shape = 'u8[512]{0}', space=vmem, size = 0x400, scoped, tag = 'input window, operand 6, single buffered']
    #allocation3 [shape = 's32[1]{0}', space=sflag, size = 0x4, scoped, tag = 'scoped memory for dqn_forward.1']
    #allocation4 [shape = 's32[1]{0}', space=sflag, size = 0x4, scoped, tag = 'scoped memory for dqn_forward.1']
    #allocation5 [shape = 'u8[4096]{0}', space=vmem, size = 0x1000, scoped, tag = 'output window, operand 0, single buffered']
    %12 = vsyncpa [#allocation3], 0
    %13 = vsyncpa [#allocation4], 0
    // Predicated region
    $region2: #{dqn_forward.1} parent=1 // pred_check
      _
    $region3: #{dqn_forward.1} parent=1 // pred_check_branch
      %15 = sbr.rel (0) target = $region5
    $region4: #{dqn_forward.1} parent=1 // pred_region
      _
    $region5: #{dqn_forward.1} parent=1 // pred_fallthru
      _
    // Predicated region
    $region6: #{dqn_forward.1} parent=1 // pred_check
      _
    $region7: #{dqn_forward.1} parent=1 // pred_check_branch
      %17 = sbr.rel (0) target = $region9
    $region8: #{dqn_forward.1} parent=1 // pred_region
      _
    $region9: #{dqn_forward.1} parent=1 // pred_fallthru
      _
    // Predicated region
    $region10: #{dqn_forward.1} parent=1 // pred_check
      _
    $region11: #{dqn_forward.1} parent=1 // pred_check_branch
      %19 = sbr.rel (0) target = $region13
    $region12: #{dqn_forward.1} parent=1 // pred_region
      _
    $region13: #{dqn_forward.1} parent=1 // pred_fallthru
      _
    // Predicated region
    $region14: #{dqn_forward.1} parent=1 // pred_check
      _
    $region15: #{dqn_forward.1} parent=1 // pred_check_branch
      %21 = sbr.rel (0) target = $region17
    $region16: #{dqn_forward.1} parent=1 // pred_region
      _
    $region17: #{dqn_forward.1} parent=1 // pred_fallthru
      _
    // Predicated region
    $region18: #{dqn_forward.1} parent=1 // pred_check
      _
    $region19: #{dqn_forward.1} parent=1 // pred_check_branch
      %23 = sbr.rel (0) target = $region21
    $region20: #{dqn_forward.1} parent=1 // pred_region
      _
    $region21: #{dqn_forward.1} parent=1 // pred_fallthru
      _
    // Predicated region
    $region22: #{dqn_forward.1} parent=1 // pred_check
      _
    $region23: #{dqn_forward.1} parent=1 // pred_check_branch
      %25 = sbr.rel (0) target = $region25
    $region24: #{dqn_forward.1} parent=1 // pred_region
      _
    $region25: #{dqn_forward.1} parent=1 // pred_fallthru
      _
    // Predicated region
    $region26: #{dqn_forward.1} parent=1 // pred_check
      _
    $region27: #{dqn_forward.1} parent=1 // pred_check_branch
      %27 = sbr.rel (0) target = $region29
    $region28: #{dqn_forward.1} parent=1 // pred_region
      %s29 = ssub.s32 16, 16
      %30 = vsyncadd [#allocation3], %s29
      %s32 = sshll.u32 [#allocation2], 4
      %s33 = int_to_ptr.vmem [resolvable:$true] %s32
      %35 = dma.hbm_to_vmem [thread:$0]  %s6, 16, %s33, [#allocation3]
    $region29: #{dqn_forward.1} parent=1 // pred_fallthru
      _
    // Predicated region
    $region30: #{dqn_forward.1} parent=1 // pred_check
      _
    $region31: #{dqn_forward.1} parent=1 // pred_check_branch
      %37 = sbr.rel (0) target = $region33
    $region32: #{dqn_forward.1} parent=1 // pred_region
      %38 = dma.done [#allocation3], 16
    $region33: #{dqn_forward.1} parent=1 // pred_fallthru
      _
    %v40 = vld [vmem:[%s1] sm:$0xf]
    %v41 = vld [vmem:[%s1 + $0x4] sm:$0xf]
    %v42 = vld [vmem:[%s3] sm:$0xf]
    %v43 = vld [vmem:[%s3 + $0x4] sm:$0xf]
    %v44 = vld [vmem:[%s3 + $0x8] sm:$0xf]
    %v45 = vld [vmem:[%s3 + $0xc] sm:$0xf]
    %v46 = vld [vmem:[%s5] sm:$0xf]
    %v47 = vld [vmem:[%s5 + $0x4] sm:$0xf]
    %v48 = vld [vmem:[%s5 + $0x8] sm:$0xf]
    %v49 = vld [vmem:[%s5 + $0xc] sm:$0xf]
    %v50 = vld [vmem:[%s2] sm:$0x1]
    %v51 = vld [vmem:[%s4] sm:$0x1]
    %v52 = vld [vmem:[#allocation2] sm:$0x1]
    %v53 = vld [vmem:[%s0] sm:$0xff]
    %v54 = vpack.c.bf16 %v53, %v53
    %v56 = vlaneseq
    %v57 = vshrl.u32 %v56, 7
    %v58 = vsub.s32 0, %v57
    %v59 = vrot.slane %v50, %v58
    %v63 = vunpack.c.l.b16 %v40
    %v64 = vunpack.c.l.b16 %v41
    %v65 = vpack.c.b16 %v64, %v63
    %vm67 = vcmask 130048
    %v69 = vsel %vm67, %v54, 0
    %71 = vmatprep.subr.bf16.mxu0 0
    %72 = vmatpush1.bf16.msra.mxu0 %v65
    %73 = vmatprep.subr.bf16.mxu0 0
    %74 = vmatpush1.bf16.msra.mxu0 0
    %75 = vmatprep.subr.bf16.mxu0 0
    %76 = vmatpush1.bf16.msra.mxu0 0
    %77 = vmatprep.subr.bf16.mxu0 0
    %78 = vmatpush1.bf16.msra.mxu0 0
    %79 = vmatprep.subr.bf16.mxu0 0
    %80 = vmatpush1.bf16.msra.mxu0 0
    %81 = vmatprep.subr.bf16.mxu0 0
    %82 = vmatpush1.bf16.msra.mxu0 0
    %83 = vmatprep.subr.bf16.mxu0 0
    %84 = vmatpush1.bf16.msra.mxu0 0
    %85 = vmatprep.subr.bf16.mxu0 0
    %86 = vmatpush1.bf16.msra.mxu0 0
    %87 = vmatprep.subr.bf16.mxu0 0
    %88 = vmatpush1.bf16.msra.mxu0 0
    %89 = vmatprep.subr.bf16.mxu0 0
    %90 = vmatpush1.bf16.msra.mxu0 0
    %91 = vmatprep.subr.bf16.mxu0 0
    %92 = vmatpush1.bf16.msra.mxu0 0
    %93 = vmatprep.subr.bf16.mxu0 0
    %94 = vmatpush1.bf16.msra.mxu0 0
    %95 = vmatprep.subr.bf16.mxu0 0
    %96 = vmatpush1.bf16.msra.mxu0 0
    %97 = vmatprep.subr.bf16.mxu0 0
    %98 = vmatpush1.bf16.msra.mxu0 0
    %99 = vmatprep.subr.bf16.mxu0 0
    %100 = vmatpush1.bf16.msra.mxu0 0
    %101 = vmatprep.subr.bf16.mxu0 0
    %102 = vmatpush1.bf16.msra.mxu0 0
    %103 = vmatprep.mubr.bf16.mxu0 0
    %104 = vmatmul.mubr.bf16.gmra.mrb[0].mxu0 %v69
    %v105 = vpop.f32.mrb[0].mxu0
    %v106 = vadd.f32 %v59, %v105
    %v107 = vpop.f32.mrb[0].mxu0
    %v108 = vpop.f32.mrb[0].mxu0
    %v109 = vpop.f32.mrb[0].mxu0
    %110 = vdwg.mxu0
    %v111 = vmax.f32 %v106, 0.0
    %v112 = vpack.c.bf16 %v111, %v111
    %v114 = vlaneseq
    %v115 = vshrl.u32 %v114, 7
    %v116 = vsub.s32 0, %v115
    %v117 = vrot.slane %v51, %v116
    %v123 = vunpack.c.l.b16 %v42
    %v124 = vunpack.c.l.b16 %v43
    %v125 = vunpack.c.l.b16 %v44
    %v126 = vunpack.c.l.b16 %v45
    %v127 = vpack.c.b16 %v124, %v123
    %v128 = vpack.c.b16 %v126, %v125
    %vm131 = vcmask 261120
    %v133 = vsel %vm131, %v112, 0
    %135 = vmatprep.subr.bf16.mxu0 0
    %136 = vmatpush1.bf16.msra.mxu0 %v127
    %137 = vmatprep.subr.bf16.mxu0 0
    %138 = vmatpush1.bf16.msra.mxu0 %v128
    %139 = vmatprep.subr.bf16.mxu0 0
    %140 = vmatpush1.bf16.msra.mxu0 0
    %141 = vmatprep.subr.bf16.mxu0 0
    %142 = vmatpush1.bf16.msra.mxu0 0
    %143 = vmatprep.subr.bf16.mxu0 0
    %144 = vmatpush1.bf16.msra.mxu0 0
    %145 = vmatprep.subr.bf16.mxu0 0
    %146 = vmatpush1.bf16.msra.mxu0 0
    %147 = vmatprep.subr.bf16.mxu0 0
    %148 = vmatpush1.bf16.msra.mxu0 0
    %149 = vmatprep.subr.bf16.mxu0 0
    %150 = vmatpush1.bf16.msra.mxu0 0
    %151 = vmatprep.subr.bf16.mxu0 0
    %152 = vmatpush1.bf16.msra.mxu0 0
    %153 = vmatprep.subr.bf16.mxu0 0
    %154 = vmatpush1.bf16.msra.mxu0 0
    %155 = vmatprep.subr.bf16.mxu0 0
    %156 = vmatpush1.bf16.msra.mxu0 0
    %157 = vmatprep.subr.bf16.mxu0 0
    %158 = vmatpush1.bf16.msra.mxu0 0
    %159 = vmatprep.subr.bf16.mxu0 0
    %160 = vmatpush1.bf16.msra.mxu0 0
    %161 = vmatprep.subr.bf16.mxu0 0
    %162 = vmatpush1.bf16.msra.mxu0 0
    %163 = vmatprep.subr.bf16.mxu0 0
    %164 = vmatpush1.bf16.msra.mxu0 0
    %165 = vmatprep.subr.bf16.mxu0 0
    %166 = vmatpush1.bf16.msra.mxu0 0
    %167 = vmatprep.mubr.bf16.mxu0 0
    %168 = vmatmul.mubr.bf16.gmra.mrb[0].mxu0 %v133
    %v169 = vpop.f32.mrb[0].mxu0
    %v170 = vadd.f32 %v117, %v169
    %v171 = vpop.f32.mrb[0].mxu0
    %v172 = vpop.f32.mrb[0].mxu0
    %v173 = vpop.f32.mrb[0].mxu0
    %174 = vdwg.mxu0
    %v175 = vmax.f32 %v170, 0.0
    %v176 = vpack.c.bf16 %v175, %v175
    %v178 = vlaneseq
    %v179 = vshrl.u32 %v178, 7
    %v180 = vsub.s32 0, %v179
    %v181 = vrot.slane %v52, %v180
    %v187 = vunpack.c.l.b16 %v46
    %v188 = vunpack.c.l.b16 %v47
    %v189 = vunpack.c.l.b16 %v48
    %v190 = vunpack.c.l.b16 %v49
    %v191 = vpack.c.b16 %v188, %v187
    %v192 = vpack.c.b16 %v190, %v189
    %v196 = vsel %vm131, %v176, 0
    %198 = vmatprep.subr.bf16.mxu0 0
    %199 = vmatpush1.bf16.msra.mxu0 %v191
    %200 = vmatprep.subr.bf16.mxu0 0
    %201 = vmatpush1.bf16.msra.mxu0 %v192
    %202 = vmatprep.subr.bf16.mxu0 0
    %203 = vmatpush1.bf16.msra.mxu0 0
    %204 = vmatprep.subr.bf16.mxu0 0
    %205 = vmatpush1.bf16.msra.mxu0 0
    %206 = vmatprep.subr.bf16.mxu0 0
    %207 = vmatpush1.bf16.msra.mxu0 0
    %208 = vmatprep.subr.bf16.mxu0 0
    %209 = vmatpush1.bf16.msra.mxu0 0
    %210 = vmatprep.subr.bf16.mxu0 0
    %211 = vmatpush1.bf16.msra.mxu0 0
    %212 = vmatprep.subr.bf16.mxu0 0
    %213 = vmatpush1.bf16.msra.mxu0 0
    %214 = vmatprep.subr.bf16.mxu0 0
    %215 = vmatpush1.bf16.msra.mxu0 0
    %216 = vmatprep.subr.bf16.mxu0 0
    %217 = vmatpush1.bf16.msra.mxu0 0
    %218 = vmatprep.subr.bf16.mxu0 0
    %219 = vmatpush1.bf16.msra.mxu0 0
    %220 = vmatprep.subr.bf16.mxu0 0
    %221 = vmatpush1.bf16.msra.mxu0 0
    %222 = vmatprep.subr.bf16.mxu0 0
    %223 = vmatpush1.bf16.msra.mxu0 0
    %224 = vmatprep.subr.bf16.mxu0 0
    %225 = vmatpush1.bf16.msra.mxu0 0
    %226 = vmatprep.subr.bf16.mxu0 0
    %227 = vmatpush1.bf16.msra.mxu0 0
    %228 = vmatprep.subr.bf16.mxu0 0
    %229 = vmatpush1.bf16.msra.mxu0 0
    %230 = vmatprep.mubr.bf16.mxu0 0
    %231 = vmatmul.mubr.bf16.gmra.mrb[0].mxu0 %v196
    %v232 = vpop.f32.mrb[0].mxu0
    %v233 = vadd.f32 %v181, %v232
    %v234 = vpop.f32.mrb[0].mxu0
    %v235 = vpop.f32.mrb[0].mxu0
    %v236 = vpop.f32.mrb[0].mxu0
    %237 = vdwg.mxu0
    %vm238 = vcmask 64512
    %239 = vst.msk [vmem:[#allocation5] sm:$0xff] %vm238, %v233
    // Predicated region
    $region34: #{dqn_forward.1} parent=1 // pred_check
      _
    $region35: #{dqn_forward.1} parent=1 // pred_check_branch
      %241 = sbr.rel (0) target = $region37
    $region36: #{dqn_forward.1} parent=1 // pred_region
      %s243 = ssub.s32 128, 128
      %244 = vsyncadd [#allocation4], %s243
      %s246 = sshll.u32 [#allocation5], 4
      %s247 = int_to_ptr.vmem [resolvable:$true] %s246
      %249 = dma.vmem_to_hbm [thread:$0]  %s247, 128, %s7, [#allocation4]
    $region37: #{dqn_forward.1} parent=1 // pred_fallthru
      _
    // Predicated region
    $region38: #{dqn_forward.1} parent=1 // pred_check
      _
    $region39: #{dqn_forward.1} parent=1 // pred_check_branch
      %251 = sbr.rel (0) target = $region41
    $region40: #{dqn_forward.1} parent=1 // pred_region
      %252 = dma.done [#allocation4], 128
    $region41: #{dqn_forward.1} parent=1 // pred_fallthru
      _
    %253 = vsyncpa [#allocation3], 1
    %254 = vsyncpa [#allocation4], 1

</llo_original>
